<compile_context>
chip_gen: v6e
topology: v6e:2x2x1
jax: 0.10.0
libtpu: 0.0.40
codegen_flags: <defaults>
</compile_context>

<pallas_src>
import functools

import jax
import jax.numpy as jnp
from jax.experimental import pallas as pl
from jax.experimental.pallas import tpu as pltpu

VP_NUM = 8  # number of viewpoint translates (module constant)


def _round_up(x, m):
    return ((x + m - 1) // m) * m


def _chamfer_kernel(p1_ref, p2_ref, out_ref, min1_ref, sum2_ref, *,
                    n_valid, scale1, scale2):
    """One (batch, gt-tile) grid step of the Chamfer distance.

    p1_ref:   (1, N1, 3)  VMEM  viewpoint centers (resident across the tile axis)
    p2_ref:   (1, 3, TN)  VMEM  streamed gt-point tile, coordinate-major
    out_ref:  (1, 1, 128) VMEM  per-batch scaled partial loss (all lanes equal)
    min1_ref: (N1, TN)    VMEM scratch, running elementwise min across tiles
    sum2_ref: (1, TN)     VMEM scratch, per-lane partial sums of dist2
    """
    k = pl.program_id(1)
    n1, tn = min1_ref.shape

    @pl.when(k == 0)
    def _init():
        min1_ref[...] = jnp.full_like(min1_ref, jnp.inf)
        sum2_ref[...] = jnp.zeros_like(sum2_ref)

    x = p1_ref[0]   # [N1, 3]   viewpoints on sublanes
    y = p2_ref[0]   # [3, TN]   gt points on lanes

    # Pairwise squared distances [N1, TN], built per coordinate on the VPU.
    d = None
    for c in range(3):
        diff = x[:, c:c + 1] - y[c:c + 1, :]          # [N1,1]-[1,TN] -> [N1,TN]
        d = diff * diff if d is None else d + diff * diff

    # Mask lanes past the true number of gt points (padding of the last tile).
    lane = jax.lax.broadcasted_iota(jnp.int32, (1, tn), 1)
    valid = (k * tn + lane) < n_valid                 # [1, TN] bool

    # dist1: for each vp point, running min over all gt points seen so far.
    min1_ref[...] = jnp.minimum(min1_ref[...], jnp.where(valid, d, jnp.inf))

    # dist2: for each gt point in this tile, min over vp points; accumulate per lane.
    m2 = jnp.min(d, axis=0, keepdims=True)            # [1, TN]
    sum2_ref[...] += jnp.where(valid, m2, 0.0)

    @pl.when(k == pl.num_programs(1) - 1)
    def _finalize():
        s1 = jnp.sum(jnp.min(min1_ref[...], axis=1, keepdims=True))   # sum_i min_j
        s2 = jnp.sum(sum2_ref[...])                                    # sum_j min_i
        partial = jnp.float32(scale1) * s1 + jnp.float32(scale2) * s2
        out_ref[...] = jnp.broadcast_to(partial, out_ref.shape)


def chamfer_distance_loss(p1, p2, *, w1=0.5, w2=1.0, max_tile_n=2048):
    """Chamfer distance. p1: [B, N1, 3], p2: [B, N2, 3] -> scalar f32 loss.

    Note: the B*N1 / B*N2 denominators match torch's mean-over-batch-and-points
    because every batch element has the same point count.
    """
    B, N1, D = p1.shape
    B2, N2, D2 = p2.shape
    assert D == 3 and D2 == 3 and B == B2
    assert max_tile_n % 128 == 0

    p1 = p1.astype(jnp.float32)
    # Coordinate-major, lane-dense layout for the streamed gt points: [B, 3, N_pad].
    p2t = jnp.transpose(p2.astype(jnp.float32), (0, 2, 1))

    tn = min(max_tile_n, _round_up(N2, 128))
    n2_pad = _round_up(N2, tn)
    if n2_pad != N2:
        p2t = jnp.pad(p2t, ((0, 0), (0, 0), (0, n2_pad - N2)))
    kt = n2_pad // tn

    kernel = functools.partial(
        _chamfer_kernel,
        n_valid=N2,
        scale1=float(w1) / float(B * N1),
        scale2=float(w2) / float(B * N2),
    )

    partials = pl.pallas_call(
        kernel,
        out_shape=jax.ShapeDtypeStruct((B, 1, 128), jnp.float32),
        grid=(B, kt),
        in_specs=[
            pl.BlockSpec((1, N1, 3), lambda b, k: (b, 0, 0)),
            pl.BlockSpec((1, 3, tn), lambda b, k: (b, 0, k)),
        ],
        out_specs=pl.BlockSpec((1, 1, 128), lambda b, k: (b, 0, 0)),
        scratch_shapes=[
            pltpu.VMEM((N1, tn), jnp.float32),   # running min for dist1
            pltpu.VMEM((1, tn), jnp.float32),    # per-lane sums for dist2
        ],
        compiler_params=pltpu.CompilerParams(
            dimension_semantics=("parallel", "arbitrary"),
            vmem_limit_bytes=16 * 1024 * 1024,
        ),
    )(p1, p2t)

    # Tiny final combine over the B per-batch partials (already w1/w2-scaled).
    return jnp.sum(partials[:, 0, 0])


def vp_diverse_loss(translates, gt_points, *, max_tile_n=2048):
    """Forward pass of VPDiverseLoss.

    translates: list of VP_NUM arrays, each [B, 3]
    gt_points:  [B, N, 3]
    """
    # check_parameters
    assert isinstance(translates, (list, tuple))
    assert len(translates) == VP_NUM
    # glue: concat into viewpoint center point cloud [B, VP_NUM, 3]
    vp_center_points = jnp.concatenate([t[:, None, :] for t in translates], axis=1)
    return chamfer_distance_loss(vp_center_points, gt_points, w1=0.5, w2=1.0,
                                 max_tile_n=max_tile_n)


def _reference_loss(translates, gt_points, w1=0.5, w2=1.0):
    """Pure-JAX reference for verification."""
    p1 = jnp.concatenate([t[:, None, :] for t in translates], axis=1)
    p2 = gt_points
    d = jnp.sum((p1[:, :, None, :] - p2[:, None, :, :]) ** 2, axis=-1)  # [B, N1, N2]
    dist1 = jnp.min(d, axis=2)  # [B, N1]
    dist2 = jnp.min(d, axis=1)  # [B, N2]
    return w1 * jnp.mean(dist1) + w2 * jnp.mean(dist2)


if __name__ == "__main__":
    key = jax.random.PRNGKey(0)
    B, N_GT, D = 2, 200, 3   # N_GT not a multiple of 128 -> exercises lane masking

    keys = jax.random.split(key, VP_NUM + 1)
    # list of VP_NUM translation vectors, each [B, 3]
    translates = [jax.random.normal(keys[i], (B, D), dtype=jnp.float32)
                  for i in range(VP_NUM)]
    # ground-truth point cloud [B, N_GT, 3]
    gt_points = jax.random.normal(keys[VP_NUM], (B, N_GT, D), dtype=jnp.float32)

    ref = jax.block_until_ready(_reference_loss(translates, gt_points))

    # Default tiling (single tile of 256 lanes for this small N).
    loss = jax.block_until_ready(vp_diverse_loss(translates, gt_points))
    assert jnp.allclose(loss, ref, atol=1e-5, rtol=1e-5), (loss, ref)

    # Forced small tiles (TN=128 -> 2 grid steps over the gt axis) to exercise
    # the streamed running-min / partial-sum path and padded-lane masking.
    loss_tiled = jax.block_until_ready(
        vp_diverse_loss(translates, gt_points, max_tile_n=128))
    assert jnp.allclose(loss_tiled, ref, atol=1e-5, rtol=1e-5), (loss_tiled, ref)

    print("KERNEL_OK")
</pallas_src>

<mosaic_0001>
module attributes {stable_mosaic.version = 11 : i64} {
  func.func @_chamfer_kernel(%arg0: i32, %arg1: i32, %arg2: memref<1x8x3xf32, #tpu.memory_space<vmem>>, %arg3: memref<1x3x256xf32, #tpu.memory_space<vmem>>, %arg4: memref<1x1x128xf32, #tpu.memory_space<vmem>>, %arg5: memref<8x256xf32, #tpu.memory_space<vmem>>, %arg6: memref<1x256xf32, #tpu.memory_space<vmem>>) attributes {dimension_semantics = [#tpu.dimension_semantics<parallel>, #tpu.dimension_semantics<arbitrary>], iteration_bounds = array<i64: 2, 1>, scalar_prefetch = 0 : i64, scratch_operands = 2 : i64, tpu.core_type = #tpu.core_type<tc>, window_params = [{transform_indices = @transform_0, window_bounds = array<i64: 1, 8, 3>}, {transform_indices = @transform_1, window_bounds = array<i64: 1, 3, 256>}, {transform_indices = @transform_2, window_bounds = array<i64: 1, 1, 128>}]} {
    %c0_i32 = arith.constant 0 : i32
    %0 = arith.cmpi eq, %arg1, %c0_i32 : i32
    %1 = arith.extui %0 : i1 to i32
    %c0_i32_0 = arith.constant 0 : i32
    %2 = arith.cmpi ne, %1, %c0_i32_0 : i32
    scf.if %2 {
      %cst_18 = arith.constant 0x7F800000 : f32
      %50 = vector.broadcast %cst_18 : f32 to vector<8x256xf32>
      %c0_19 = arith.constant 0 : index
      %c0_20 = arith.constant 0 : index
      %51 = vector.load %arg5[%c0_19, %c0_20] : memref<8x256xf32, #tpu.memory_space<vmem>>, vector<8x256xf32>
      tpu.vector_store %arg5[%c0_19, %c0_20], %50 {strides = array<i32>} : memref<8x256xf32, #tpu.memory_space<vmem>>, vector<8x256xf32>,
      %cst_21 = arith.constant 0.000000e+00 : f32
      %52 = vector.broadcast %cst_21 : f32 to vector<1x256xf32>
      %c0_22 = arith.constant 0 : index
      %c0_23 = arith.constant 0 : index
      %53 = vector.load %arg6[%c0_22, %c0_23] : memref<1x256xf32, #tpu.memory_space<vmem>>, vector<1x256xf32>
      tpu.vector_store %arg6[%c0_22, %c0_23], %52 {strides = array<i32>} : memref<1x256xf32, #tpu.memory_space<vmem>>, vector<1x256xf32>,
    } else {
    }
    %c0 = arith.constant 0 : index
    %c0_1 = arith.constant 0 : index
    %c0_2 = arith.constant 0 : index
    %3 = vector.load %arg2[%c0, %c0_1, %c0_2] : memref<1x8x3xf32, #tpu.memory_space<vmem>>, vector<1x8x3xf32>
    %4 = vector.shape_cast %3 : vector<1x8x3xf32> to vector<8x3xf32>
    %c0_3 = arith.constant 0 : index
    %c0_4 = arith.constant 0 : index
    %c0_5 = arith.constant 0 : index
    %5 = vector.load %arg3[%c0_3, %c0_4, %c0_5] : memref<1x3x256xf32, #tpu.memory_space<vmem>>, vector<1x3x256xf32>
    %6 = vector.shape_cast %5 : vector<1x3x256xf32> to vector<3x256xf32>
    %7 = vector.extract_strided_slice %4 {offsets = [0, 0], sizes = [8, 1], strides = [1, 1]} : vector<8x3xf32> to vector<8x1xf32>
    %8 = vector.extract_strided_slice %6 {offsets = [0, 0], sizes = [1, 256], strides = [1, 1]} : vector<3x256xf32> to vector<1x256xf32>
    %9 = vector.broadcast %7 : vector<8x1xf32> to vector<8x256xf32>
    %10 = vector.broadcast %8 : vector<1x256xf32> to vector<8x256xf32>
    %11 = arith.subf %9, %10 : vector<8x256xf32>
    %12 = arith.mulf %11, %11 : vector<8x256xf32>
    %13 = vector.extract_strided_slice %4 {offsets = [0, 1], sizes = [8, 1], strides = [1, 1]} : vector<8x3xf32> to vector<8x1xf32>
    %14 = vector.extract_strided_slice %6 {offsets = [1, 0], sizes = [1, 256], strides = [1, 1]} : vector<3x256xf32> to vector<1x256xf32>
    %15 = vector.broadcast %13 : vector<8x1xf32> to vector<8x256xf32>
    %16 = vector.broadcast %14 : vector<1x256xf32> to vector<8x256xf32>
    %17 = arith.subf %15, %16 : vector<8x256xf32>
    %18 = arith.mulf %17, %17 : vector<8x256xf32>
    %19 = arith.addf %12, %18 : vector<8x256xf32>
    %20 = vector.extract_strided_slice %4 {offsets = [0, 2], sizes = [8, 1], strides = [1, 1]} : vector<8x3xf32> to vector<8x1xf32>
    %21 = vector.extract_strided_slice %6 {offsets = [2, 0], sizes = [1, 256], strides = [1, 1]} : vector<3x256xf32> to vector<1x256xf32>
    %22 = vector.broadcast %20 : vector<8x1xf32> to vector<8x256xf32>
    %23 = vector.broadcast %21 : vector<1x256xf32> to vector<8x256xf32>
    %24 = arith.subf %22, %23 : vector<8x256xf32>
    %25 = arith.mulf %24, %24 : vector<8x256xf32>
    %26 = arith.addf %19, %25 : vector<8x256xf32>
    %27 = tpu.iota {dimensions = array<i32: 1>} : vector<1x256xi32>
    %c256_i32 = arith.constant 256 : i32
    %28 = arith.muli %arg1, %c256_i32 : i32
    %29 = vector.broadcast %28 : i32 to vector<1x256xi32>
    %30 = arith.addi %29, %27 : vector<1x256xi32>
    %c200_i32 = arith.constant 200 : i32
    %31 = vector.broadcast %c200_i32 : i32 to vector<1x256xi32>
    %32 = arith.cmpi slt, %30, %31 : vector<1x256xi32>
    %c0_6 = arith.constant 0 : index
    %c0_7 = arith.constant 0 : index
    %33 = vector.load %arg5[%c0_6, %c0_7] : memref<8x256xf32, #tpu.memory_space<vmem>>, vector<8x256xf32>
    %cst = arith.constant 0x7F800000 : f32
    %34 = vector.shape_cast %32 : vector<1x256xi1> to vector<1x256xi1>
    %35 = vector.broadcast %34 : vector<1x256xi1> to vector<8x256xi1>
    %36 = vector.broadcast %cst : f32 to vector<8x256xf32>
    %37 = arith.select %35, %26, %36 : vector<8x256xi1>, vector<8x256xf32>
    %38 = arith.minimumf %33, %37 : vector<8x256xf32>
    %c0_8 = arith.constant 0 : index
    %c0_9 = arith.constant 0 : index
    %39 = vector.load %arg5[%c0_8, %c0_9] : memref<8x256xf32, #tpu.memory_space<vmem>>, vector<8x256xf32>
    tpu.vector_store %arg5[%c0_8, %c0_9], %38 {strides = array<i32>} : memref<8x256xf32, #tpu.memory_space<vmem>>, vector<8x256xf32>,
    %cst_10 = arith.constant dense<0x7F800000> : vector<256xf32>
    %40 = vector.multi_reduction <minimumf>, %26, %cst_10 [0] : vector<8x256xf32> to vector<256xf32>
    %41 = vector.shape_cast %40 : vector<256xf32> to vector<1x256xf32>
    %c0_11 = arith.constant 0 : index
    %c0_12 = arith.constant 0 : index
    %42 = vector.load %arg6[%c0_11, %c0_12] : memref<1x256xf32, #tpu.memory_space<vmem>>, vector<1x256xf32>
    %cst_13 = arith.constant 0.000000e+00 : f32
    %43 = vector.broadcast %cst_13 : f32 to vector<1x256xf32>
    %44 = arith.select %32, %41, %43 : vector<1x256xi1>, vector<1x256xf32>
    %45 = arith.addf %42, %44 : vector<1x256xf32>
    %c0_14 = arith.constant 0 : index
    %c0_15 = arith.constant 0 : index
    %46 = vector.load %arg6[%c0_14, %c0_15] : memref<1x256xf32, #tpu.memory_space<vmem>>, vector<1x256xf32>
    tpu.vector_store %arg6[%c0_14, %c0_15], %45 {strides = array<i32>} : memref<1x256xf32, #tpu.memory_space<vmem>>, vector<1x256xf32>,
    %c0_i32_16 = arith.constant 0 : i32
    %47 = arith.cmpi eq, %arg1, %c0_i32_16 : i32
    %48 = arith.extui %47 : i1 to i32
    %c0_i32_17 = arith.constant 0 : i32
    %49 = arith.cmpi ne, %48, %c0_i32_17 : i32
    scf.if %49 {
      %c0_18 = arith.constant 0 : index
      %c0_19 = arith.constant 0 : index
      %50 = vector.load %arg5[%c0_18, %c0_19] : memref<8x256xf32, #tpu.memory_space<vmem>>, vector<8x256xf32>
      %cst_20 = arith.constant dense<0x7F800000> : vector<8xf32>
      %51 = vector.multi_reduction <minimumf>, %50, %cst_20 [1] : vector<8x256xf32> to vector<8xf32>
      %52 = vector.shape_cast %51 : vector<8xf32> to vector<8x1xf32>
      %53 = vector.shape_cast %52 : vector<8x1xf32> to vector<1x8x1xf32>
      %cst_21 = arith.constant dense<0.000000e+00> : vector<1xf32>
      %54 = vector.multi_reduction <add>, %53, %cst_21 [1, 2] : vector<1x8x1xf32> to vector<1xf32>
      %55 = vector.shape_cast %54 : vector<1xf32> to vector<1x1x1xf32>
      %56 = vector.extract %55[0, 0, 0] : f32 from vector<1x1x1xf32>
      %c0_22 = arith.constant 0 : index
      %c0_23 = arith.constant 0 : index
      %57 = vector.load %arg6[%c0_22, %c0_23] : memref<1x256xf32, #tpu.memory_space<vmem>>, vector<1x256xf32>
      %58 = vector.shape_cast %57 : vector<1x256xf32> to vector<1x1x256xf32>
      %cst_24 = arith.constant dense<0.000000e+00> : vector<1xf32>
      %59 = vector.multi_reduction <add>, %58, %cst_24 [1, 2] : vector<1x1x256xf32> to vector<1xf32>
      %60 = vector.shape_cast %59 : vector<1xf32> to vector<1x1x1xf32>
      %61 = vector.extract %60[0, 0, 0] : f32 from vector<1x1x1xf32>
      %cst_25 = arith.constant 3.125000e-02 : f32
      %62 = arith.mulf %cst_25, %56 : f32
      %cst_26 = arith.constant 2.500000e-03 : f32
      %63 = arith.mulf %cst_26, %61 : f32
      %64 = arith.addf %62, %63 : f32
      %65 = vector.broadcast %64 : f32 to vector<1x1x128xf32>
      %c0_27 = arith.constant 0 : index
      %c0_28 = arith.constant 0 : index
      %c0_29 = arith.constant 0 : index
      %66 = vector.load %arg4[%c0_27, %c0_28, %c0_29] : memref<1x1x128xf32, #tpu.memory_space<vmem>>, vector<1x1x128xf32>
      tpu.vector_store %arg4[%c0_27, %c0_28, %c0_29], %65 {strides = array<i32>} : memref<1x1x128xf32, #tpu.memory_space<vmem>>, vector<1x1x128xf32>,
    } else {
    }
    return
  }
  func.func @transform_0(%arg0: i32, %arg1: i32) -> (i32, i32, i32) {
    %c0_i32 = arith.constant 0 : i32
    %c0_i32_0 = arith.constant 0 : i32
    %c0_i32_1 = arith.constant 0 : i32
    return %arg0, %c0_i32, %c0_i32_0 : i32, i32, i32
  }
  func.func @transform_1(%arg0: i32, %arg1: i32) -> (i32, i32, i32) {
    %c0_i32 = arith.constant 0 : i32
    %c0_i32_0 = arith.constant 0 : i32
    return %arg0, %c0_i32, %arg1 : i32, i32, i32
  }
  func.func @transform_2(%arg0: i32, %arg1: i32) -> (i32, i32, i32) {
    %c0_i32 = arith.constant 0 : i32
    %c0_i32_0 = arith.constant 0 : i32
    %c0_i32_1 = arith.constant 0 : i32
    return %arg0, %c0_i32, %c0_i32_0 : i32, i32, i32
  }
}

</mosaic_0001>

<llo_original>
// kernel: tpu_custom_call.1
$region0: #{tpu_custom_call.1}
  #allocation0 [shape = 'u32[]', space=smem, size = 0x4, offset = 0x4, fixed_abs, tag = 'smem constant byte address 0x4 - core index']
  #allocation1 [shape = 'u32[144,128]{1,0:T(1,128)}', space=vmem, size = 0x12000, scoped, tag = 'internal scratch']
  #allocation2 [shape = 'f32[8,256]{1,0:T(8,128)}', space=vmem, size = 0x2000, scoped, tag = 'scratch operand']
  #allocation3 [shape = 'f32[1,256]{1,0:T(1,128)}', space=vmem, size = 0x400, scoped, tag = 'scratch operand']
  %s0 = inlined_call_operand.vmem [shape: f32[2,8,3], index: 0, kind: input, shape index: {}]
  %s1 = inlined_call_operand.vmem [shape: f32[2,3,256], index: 1, kind: input, shape index: {}]
  %s2 = inlined_call_operand.hbm [shape: f32[2,1,128], index: 2, kind: output, shape index: {}]
  %s3 = sld [smem:[#allocation0]]
  $region49: #{tpu_custom_call.1} parent=0
    _
  %s5 = ssub.s32 1, %s3
  %s6 = scalar_select 0, %s5, %s3
  $region1: #{tpu_custom_call.1} parent=0
    #allocation4 [shape = 'u8[1024]{0}', space=vmem, size = 0x400, scoped, tag = 'output window, operand 0']
    #allocation5 [shape = 's32[2]{0}', space=sflag, size = 0x8, scoped, tag = 'scoped memory for tpu_custom_call.1']
    %7 = vsyncpa [#allocation5], 0
    %s8 = scalar_lea.sflag [#allocation5], 1
    %9 = vsyncpa %s8, 0
    loop: start=0, step=1, limit=4
    $region2: #{tpu_custom_call.1} parent=1 // loop_pre_header
      _
    $region3: #{tpu_custom_call.1} parent=1 // loop_header
      %s11 = sphi 0, %s15
      %p12 = scmp.ge.s32.totalorder %s11, 4
      %s18 = sphi 0, %s30
      %s19 = sphi 0, %s26
      %s20 = sphi 0, %s18
      %s21 = sphi 0, %s19
      %s22 = sphi 0, %s20
      %s23 = sphi 0, %s21
      %s33 = sphi 0, %s35
      %s36 = sphi 0, %s33
      %s37 = sphi 0, %s36
      %s53 = sphi 0, %s37
      %s61 = sphi 0, %s63
      %s64 = sphi 0, %s61
      %s65 = sphi 0, %s64
      %s81 = sphi 0, %s65
      %s87 = sphi 0, %s89
      %s90 = sphi 0, %s87
      %s91 = sphi 0, %s90
      %s107 = sphi 0, %s91
    $region4: #{tpu_custom_call.1} parent=1 // loop_header_branch
      %14 = sbr.rel (%p12) target = $region8
    $region5: #{tpu_custom_call.1} parent=1 // loop_body
      %s16 = ssub.s32 %s11, 1
      %s17 = ssub.s32 %s11, 2
      %s24 = sadd.s32 1, %s19
      %p25 = scmp.ge.s32.totalorder %s24, 1
      %s26 = scalar_select %p25, 0, %s24
      %s27 = sadd.s32 1, %s18
      %s28 = scalar_select %p25, %s27, %s18
      %p29 = scmp.ge.s32.totalorder %s28, 2
      %s30 = scalar_select %p29, 0, %s28
      %s31 = ssub.s32 %s18, %s30
      %p32 = scmp.eq.s32.totalorder %s31, 0
      %s34 = sadd.s32 %s33, 1
      %s35 = scalar_select %p32, %s33, %s34
      %p38 = pneg %p32
      %p39 = scmp.eq.s32.totalorder %s11, 1
      %p40 = por %p38, %p39
      %p41 = scmp.ne.s32.totalorder %s33, %s36
      %p42 = scmp.eq.s32.totalorder %s11, 0
      %p43 = por %p41, %p42
      %p44 = scmp.ne.s32.totalorder %s33, %s36
      %p45 = scmp.eq.s32.totalorder %s16, 1
      %p46 = por %p44, %p45
      %p47 = scmp.ne.s32.totalorder %s36, %s37
      %p48 = scmp.eq.s32.totalorder %s16, 0
      %p49 = por %p47, %p48
      %p50 = scmp.ne.s32.totalorder %s36, %s37
      %p51 = scmp.eq.s32.totalorder %s17, 1
      %p52 = por %p50, %p51
      %p54 = scmp.ne.s32.totalorder %s37, %s53
      %p55 = scmp.eq.s32.totalorder %s17, 0
      %p56 = por %p54, %p55
      %s57 = ssub.s32 %s18, %s30
      %s58 = ssub.s32 %s19, %s26
      %s59 = sor.u32 %s57, %s58
      %p60 = scmp.eq.s32.totalorder %s59, 0
      %s62 = sadd.s32 %s61, 1
      %s63 = scalar_select %p60, %s61, %s62
      %p66 = pneg %p60
      %p67 = scmp.eq.s32.totalorder %s11, 1
      %p68 = por %p66, %p67
      %p69 = scmp.ne.s32.totalorder %s61, %s64
      %p70 = scmp.eq.s32.totalorder %s11, 0
      %p71 = por %p69, %p70
      %p72 = scmp.ne.s32.totalorder %s61, %s64
      %p73 = scmp.eq.s32.totalorder %s16, 1
      %p74 = por %p72, %p73
      %p75 = scmp.ne.s32.totalorder %s64, %s65
      %p76 = scmp.eq.s32.totalorder %s16, 0
      %p77 = por %p75, %p76
      %p78 = scmp.ne.s32.totalorder %s64, %s65
      %p79 = scmp.eq.s32.totalorder %s17, 1
      %p80 = por %p78, %p79
      %p82 = scmp.ne.s32.totalorder %s65, %s81
      %p83 = scmp.eq.s32.totalorder %s17, 0
      %p84 = por %p82, %p83
      %s85 = ssub.s32 %s18, %s30
      %p86 = scmp.eq.s32.totalorder %s85, 0
      %s88 = sadd.s32 %s87, 1
      %s89 = scalar_select %p86, %s87, %s88
      %p92 = pneg %p86
      %p93 = scmp.eq.s32.totalorder %s11, 1
      %p94 = por %p92, %p93
      %p95 = scmp.ne.s32.totalorder %s87, %s90
      %p96 = scmp.eq.s32.totalorder %s11, 0
      %p97 = por %p95, %p96
      %p98 = scmp.ne.s32.totalorder %s87, %s90
      %p99 = scmp.eq.s32.totalorder %s16, 1
      %p100 = por %p98, %p99
      %p101 = scmp.ne.s32.totalorder %s90, %s91
      %p102 = scmp.eq.s32.totalorder %s16, 0
      %p103 = por %p101, %p102
      %p104 = scmp.ne.s32.totalorder %s90, %s91
      %p105 = scmp.eq.s32.totalorder %s17, 1
      %p106 = por %p104, %p105
      %p108 = scmp.ne.s32.totalorder %s91, %s107
      %p109 = scmp.eq.s32.totalorder %s17, 0
      %p110 = por %p108, %p109
      %p111 = scmp.le.s32.totalorder 1, %s11
      %p112 = scmp.lt.s32.totalorder %s11, 3
      %p113 = pnand %p111, %p112
      %p114 = pneg %p113
      // Predicated region
      $region9: #{tpu_custom_call.1} parent=5 // pred_check
        _
      $region10: #{tpu_custom_call.1} parent=5 // pred_check_branch
        %116 = sbr.rel (%p113) target = $region12
      $region11: #{tpu_custom_call.1} parent=5 // pred_region
        %s117 = ssub.s32 %s11, 1
      $region12: #{tpu_custom_call.1} parent=5 // pred_fallthru
        _
      %p118 = scmp.lt.s32.totalorder %s11, 2
      // Predicated region
      $region13: #{tpu_custom_call.1} parent=5 // pred_check
        %p119 = pneg %p118
      $region14: #{tpu_custom_call.1} parent=5 // pred_check_branch
        %121 = sbr.rel (%p119) target = $region16
      $region15: #{tpu_custom_call.1} parent=5 // pred_region
        // Predicated region
        $region17: #{tpu_custom_call.1} parent=15 // pred_check
          %p122 = pneg %p43
        $region18: #{tpu_custom_call.1} parent=15 // pred_check_branch
          %124 = sbr.rel (%p122) target = $region20
        $region19: #{tpu_custom_call.1} parent=15 // pred_region
          %p125 = scmp.lt.s32.totalorder %s18, 1
          %s126 = scalar_select %p125, %s18, 1
          %s127 = smul.addr %s126, 8
          %s128 = scalar_lea.vmem %s0, %s127
        $region20: #{tpu_custom_call.1} parent=15 // pred_fallthru
          _
        // Predicated region
        $region21: #{tpu_custom_call.1} parent=15 // pred_check
          %p129 = pneg %p71
        $region22: #{tpu_custom_call.1} parent=15 // pred_check_branch
          %131 = sbr.rel (%p129) target = $region24
        $region23: #{tpu_custom_call.1} parent=15 // pred_region
          %s132 = smul.u32 2, %s19
          %p133 = scmp.lt.s32.totalorder %s18, 1
          %s134 = scalar_select %p133, %s18, 1
          %p135 = scmp.lt.s32.totalorder %s132, 1
          %s136 = scalar_select %p135, %s132, 1
          %s137 = smul.addr %s134, 2
          %s138 = sadd.s32 %s136, %s137
          %s139 = smul.addr %s138, 4
          %s140 = scalar_lea.vmem %s1, %s139
          %s141 = smul.u32 2, %s19
        $region24: #{tpu_custom_call.1} parent=15 // pred_fallthru
          _
      $region16: #{tpu_custom_call.1} parent=5 // pred_fallthru
        _
      %p142 = scmp.le.s32.totalorder 1, %s11
      %p143 = scmp.lt.s32.totalorder %s11, 3
      %p144 = pnand %p142, %p143
      %p145 = pneg %p144
      // Predicated region
      $region25: #{tpu_custom_call.1} parent=5 // pred_check
        _
      $region26: #{tpu_custom_call.1} parent=5 // pred_check_branch
        %147 = sbr.rel (%p144) target = $region28
      $region27: #{tpu_custom_call.1} parent=5 // pred_region
        %s148 = ssub.s32 %s11, 1
        %p149 = scmp.lt.s32.totalorder %s20, 1
        %s150 = scalar_select %p149, %s20, 1
        %s151 = smul.addr %s150, 8
        %s152 = scalar_lea.vmem %s0, %s151
        %p153 = pneg %p49
        %p154 = pneg %p46
        %s155 = smul.u32 2, %s21
        %p156 = scmp.lt.s32.totalorder %s20, 1
        %s157 = scalar_select %p156, %s20, 1
        %p158 = scmp.lt.s32.totalorder %s155, 1
        %s159 = scalar_select %p158, %s155, 1
        %s160 = smul.addr %s157, 2
        %s161 = sadd.s32 %s159, %s160
        %s162 = smul.addr %s161, 4
        %s163 = scalar_lea.vmem %s1, %s162
        %p164 = pneg %p77
        %p165 = pneg %p74
        %p166 = pneg %p103
        %p167 = pneg %p100
        %s168 = sand.u32 %s90, 1
        %s169 = scalar_lea.sflag [#allocation5], %s168
        %s170 = sand.u32 %s90, 1
        %s171 = scalar_lea.vmem [#allocation4], %s170
        %p172 = scmp.lt.s32.totalorder %s20, 1
        %s173 = scalar_select %p172, %s20, 1
        %s174 = smul.addr %s173, 8
        %s175 = scalar_lea.vmem %s0, %s174
        %s176 = smul.u32 2, %s21
        %p177 = scmp.lt.s32.totalorder %s20, 1
        %s178 = scalar_select %p177, %s20, 1
        %p179 = scmp.lt.s32.totalorder %s176, 1
        %s180 = scalar_select %p179, %s176, 1
        %s181 = smul.addr %s178, 2
        %s182 = sadd.s32 %s180, %s181
        %s183 = smul.addr %s182, 4
        %s184 = scalar_lea.vmem %s1, %s183
        %s185 = smul.u32 2, %s21
        %p186 = scmp.eq.s32.totalorder %s21, 0
        // Predicated region
        $region29: #{tpu_custom_call.1} parent=27 // pred_check
          %p187 = pneg %p186
        $region30: #{tpu_custom_call.1} parent=27 // pred_check_branch
          %189 = sbr.rel (%p187) target = $region32
        $region31: #{tpu_custom_call.1} parent=27 // pred_region
          %190 = vst [vmem:[#allocation2] sm:$0xff] inf
          %191 = vst [vmem:[#allocation2 + $0x8] sm:$0xff] inf
          %v192 = vlaneseq
          %vm193 = vcmp.ge.s32.totalorder %v192, 0
          %vm194 = vcmp.lt.s32.totalorder %v192, 256
          %vm195 = vmand %vm193, %vm194
          %196 = vst.msk [vmem:[#allocation3] sm:$0x3] %vm195, 0.0
        $region32: #{tpu_custom_call.1} parent=27 // pred_fallthru
          _
        %v197 = vld [vmem:[%s175] sm:$0xff]
        %v198 = vld [vmem:[%s184] sm:$0x77]
        %200 = vset.pattern.permute.xlu0 0
        %201 = vperm.xlu0 %200, %v197
        %v202 = vpop.permute.xlu0 %201
        %v205 = vlaneseq
        %v206 = vshrl.u32 %v205, 7
        %v207 = vsub.s32 0, %v206
        %v208 = vrot.slane %v198, %v207
        %v209 = vlaneseq
        %v210 = vshrl.u32 %v209, 7
        %v211 = vsub.s32 4, %v210
        %v212 = vrot.slane %v198, %v211
        %v215 = vlaneseq
        %v216 = vshrl.u32 %v215, 7
        %v217 = vsub.s32 0, %v216
        %v218 = vrot.slane %v208, %v217
        %v219 = vlaneseq
        %v220 = vshrl.u32 %v219, 7
        %v221 = vsub.s32 0, %v220
        %v222 = vrot.slane %v212, %v221
        %v223 = vsub.f32 %v202, %v218
        %v224 = vsub.f32 %v202, %v222
        %v225 = vmul.f32 %v223, %v223
        %v226 = vmul.f32 %v224, %v224
        %227 = vset.pattern.permute.xlu0 1
        %228 = vperm.xlu0 %227, %v197
        %v229 = vpop.permute.xlu0 %228
        %v231 = vlaneseq
        %v232 = vshrl.u32 %v231, 7
        %v233 = vsub.s32 1, %v232
        %v234 = vrot.slane %v198, %v233
        %v235 = vlaneseq
        %v236 = vshrl.u32 %v235, 7
        %v237 = vsub.s32 5, %v236
        %v238 = vrot.slane %v198, %v237
        %v241 = vlaneseq
        %v242 = vshrl.u32 %v241, 7
        %v243 = vsub.s32 1, %v242
        %v244 = vrot.slane %v234, %v243
        %v245 = vlaneseq
        %v246 = vshrl.u32 %v245, 7
        %v247 = vsub.s32 1, %v246
        %v248 = vrot.slane %v238, %v247
        %v249 = vsub.f32 %v229, %v244
        %v250 = vsub.f32 %v229, %v248
        %v251 = vmul.f32 %v249, %v249
        %v252 = vmul.f32 %v250, %v250
        %v253 = vadd.f32 %v225, %v251
        %v254 = vadd.f32 %v226, %v252
        %255 = vset.pattern.permute.xlu0 2
        %256 = vperm.xlu0 %255, %v197
        %v257 = vpop.permute.xlu0 %256
        %v259 = vlaneseq
        %v260 = vshrl.u32 %v259, 7
        %v261 = vsub.s32 2, %v260
        %v262 = vrot.slane %v198, %v261
        %v263 = vlaneseq
        %v264 = vshrl.u32 %v263, 7
        %v265 = vsub.s32 6, %v264
        %v266 = vrot.slane %v198, %v265
        %v269 = vlaneseq
        %v270 = vshrl.u32 %v269, 7
        %v271 = vsub.s32 2, %v270
        %v272 = vrot.slane %v262, %v271
        %v273 = vlaneseq
        %v274 = vshrl.u32 %v273, 7
        %v275 = vsub.s32 2, %v274
        %v276 = vrot.slane %v266, %v275
        %v277 = vsub.f32 %v257, %v272
        %v278 = vsub.f32 %v257, %v276
        %v279 = vmul.f32 %v277, %v277
        %v280 = vmul.f32 %v278, %v278
        %v281 = vadd.f32 %v253, %v279
        %v282 = vadd.f32 %v254, %v280
        %v283 = vlaneseq
        %v284 = vand.u32 %v283, 127
        %v285 = vadd.s32 %v284, 128
        %s286 = smul.u32 %s21, 256
        %v287 = vstv %s286
        %v288 = vadd.s32 %v287, %v284
        %v289 = vadd.s32 %v287, %v285
        %vm290 = vcmp.lt.s32.totalorder %v288, 200
        %vm291 = vcmp.lt.s32.totalorder %v289, 200
        %v292 = vld [vmem:[#allocation2] sm:$0xff]
        %v293 = vld [vmem:[#allocation2 + $0x8] sm:$0xff]
        %v294 = vsel %vm290, 1, 0
        %v295 = vsel %vm291, 1, 0
        %vm296 = vcmp.eq.s32.totalorder %v294, 1
        %vm297 = vcmp.eq.s32.totalorder %v295, 1
        %v298 = vsel %vm296, %v281, inf
        %v299 = vsel %vm297, %v282, inf
        %v300 = vmin.f32 %v292, %v298
        %v301 = vmin.f32 %v293, %v299
        %302 = vst [vmem:[#allocation2] sm:$0xff] %v300
        %303 = vst [vmem:[#allocation2 + $0x8] sm:$0xff] %v301
        %v304 = vrot.slane %v281, 4
        %v305 = vmin.f32 %v281, %v304
        %v306 = vrot.slane %v305, 2
        %v307 = vmin.f32 %v305, %v306
        %v308 = vrot.slane %v307, 1
        %v309 = vmin.f32 %v307, %v308
        %v310 = vrot.slane %v282, 4
        %v311 = vmin.f32 %v282, %v310
        %v312 = vrot.slane %v311, 2
        %v313 = vmin.f32 %v311, %v312
        %v314 = vrot.slane %v313, 1
        %v315 = vmin.f32 %v313, %v314
        %v316 = vld [vmem:[#allocation3] sm:$0x3]
        %v317 = vsel %vm290, %v309, 0.0
        %v318 = vsel %vm291, %v315, 0.0
        %v321 = vcombine.low %v317, %v318
        %v323 = vunpack.c.l.s4 1966171168
        %v324 = vunpack.c.0.s8 %v323
        %v325 = vlaneseq
        %v326 = vshrl.u32 %v325, 7
        %v327 = vsub.s32 %v324, %v326
        %v328 = vrot.slane %v321, %v327
        %v330 = vunpack.c.l.s4 1966171168
        %v331 = vunpack.c.0.s8 %v330
        %v332 = vlaneseq
        %v333 = vshrl.u32 %v332, 7
        %v334 = vsub.s32 %v331, %v333
        %v335 = vrot.slane %v328, %v334
        %v337 = vadd.f32 %v316, %v335
        %v338 = vlaneseq
        %vm339 = vcmp.ge.s32.totalorder %v338, 0
        %vm340 = vcmp.lt.s32.totalorder %v338, 256
        %vm341 = vmand %vm339, %vm340
        %342 = vst.msk [vmem:[#allocation3] sm:$0x3] %vm341, %v337
        // Predicated region
        $region33: #{tpu_custom_call.1} parent=27 // pred_check
          %p343 = pneg %p186
        $region34: #{tpu_custom_call.1} parent=27 // pred_check_branch
          %345 = sbr.rel (%p343) target = $region36
        $region35: #{tpu_custom_call.1} parent=27 // pred_region
          %v346 = vld [vmem:[#allocation2] sm:$0xff]
          %v347 = vld [vmem:[#allocation2 + $0x8] sm:$0xff]
          %v348 = vmin.f32 %v346, %v347
          %349 = vmin.xlane.f32.xlu0 %v348
          %v350 = vpop.xlane.xlu0 %349
          %vm351 = vcmask 7168
          %v352 = vsel %vm351, %v350, 0.0
          %353 = vadd.xlane.f32.xlu0 %v352
          %v354 = vpop.xlane.xlu0 %353
          %v355 = vrot.slane %v354, 4
          %v356 = vadd.f32 %v354, %v355
          %v357 = vrot.slane %v356, 2
          %v358 = vadd.f32 %v356, %v357
          %v359 = vrot.slane %v358, 1
          %v360 = vadd.f32 %v358, %v359
          %s361 = vtos %v360
          %v362 = vld [vmem:[#allocation3] sm:$0x3]
          %v364 = vlaneseq
          %v365 = vshrl.u32 %v364, 7
          %v366 = vsub.s32 0, %v365
          %v367 = vrot.slane %v362, %v366
          %v368 = vlaneseq
          %v369 = vshrl.u32 %v368, 7
          %v370 = vsub.s32 1, %v369
          %v371 = vrot.slane %v362, %v370
          %vm374 = vcmask 1040384
          %v375 = vsel %vm374, %v367, 0.0
          %v376 = vsel %vm374, %v371, 0.0
          %v377 = vadd.f32 %v375, %v376
          %378 = vadd.xlane.f32.xlu0 %v377
          %v379 = vpop.xlane.xlu0 %378
          %v380 = vrot.slane %v379, 4
          %v381 = vadd.f32 %v379, %v380
          %v382 = vrot.slane %v381, 2
          %v383 = vadd.f32 %v381, %v382
          %v384 = vrot.slane %v383, 1
          %v385 = vadd.f32 %v383, %v384
          %s386 = vtos %v385
          %s387 = smul.f32 %s361, 0.03125
          %s388 = smul.f32 %s386, 0.0025
          %s389 = sadd.f32 %s387, %s388
          %v390 = vstv %s389
          %391 = vst [vmem:[%s171] sm:$0x1] %v390
        $region36: #{tpu_custom_call.1} parent=27 // pred_fallthru
          _
        %s392 = sand.u32 %s90, 1
        %s393 = scalar_lea.sflag [#allocation5], %s392
        %s394 = sand.u32 %s90, 1
        %s395 = scalar_lea.vmem [#allocation4], %s394
        // Predicated region
        $region37: #{tpu_custom_call.1} parent=27 // pred_check
          %p396 = pneg %p100
        $region38: #{tpu_custom_call.1} parent=27 // pred_check_branch
          %398 = sbr.rel (%p396) target = $region40
        $region39: #{tpu_custom_call.1} parent=27 // pred_region
          %s400 = ssub.s32 16, 16
          %401 = vsyncadd %s393, %s400
          %s402 = smul.addr %s20, 16
          %s403 = scalar_lea.hbm %s2, %s402
          %s405 = sshll.u32 %s395, 4
          %s406 = int_to_ptr.vmem [resolvable:$true] %s405
          %408 = dma.vmem_to_hbm [thread:$0]  %s406, 16, %s403, %s393
        $region40: #{tpu_custom_call.1} parent=27 // pred_fallthru
          _
      $region28: #{tpu_custom_call.1} parent=5 // pred_fallthru
        _
      %p409 = scmp.le.s32.totalorder 2, %s11
      // Predicated region
      $region41: #{tpu_custom_call.1} parent=5 // pred_check
        %p410 = pneg %p409
      $region42: #{tpu_custom_call.1} parent=5 // pred_check_branch
        %412 = sbr.rel (%p410) target = $region44
      $region43: #{tpu_custom_call.1} parent=5 // pred_region
        %s413 = ssub.s32 %s11, 2
        // Predicated region
        $region45: #{tpu_custom_call.1} parent=43 // pred_check
          %p414 = pneg %p106
        $region46: #{tpu_custom_call.1} parent=43 // pred_check_branch
          %416 = sbr.rel (%p414) target = $region48
        $region47: #{tpu_custom_call.1} parent=43 // pred_region
          %s417 = sand.u32 %s91, 1
          %s418 = scalar_lea.sflag [#allocation5], %s417
          %s419 = sand.u32 %s91, 1
          %s420 = scalar_lea.vmem [#allocation4], %s419
          %421 = dma.done %s418, 16
        $region48: #{tpu_custom_call.1} parent=43 // pred_fallthru
          _
      $region44: #{tpu_custom_call.1} parent=5 // pred_fallthru
        _
    $region6: #{tpu_custom_call.1} parent=1 // loop_footer
      %s15 = sadd.s32 1, %s11
    $region7: #{tpu_custom_call.1} parent=1 // loop_footer_branch
      %10 = sbr.rel target = $region3
    $region8: #{tpu_custom_call.1} parent=1 // loop_exit
      _
    %422 = vsyncpa [#allocation5], 1
    %s423 = scalar_lea.sflag [#allocation5], 1
    %424 = vsyncpa %s423, 1

</llo_original>
